<compile_context>
chip_gen: v6e
topology: v6e:2x2x1
jax: 0.10.0
libtpu: 0.0.40
codegen_flags: <defaults>
</compile_context>

<pallas_src>
import jax
import jax.numpy as jnp
import numpy as np
from jax.experimental import pallas as pl
from jax.experimental.pallas import tpu as pltpu

# ----------------------------- configuration -------------------------------
V = 50          # vocab size (unused in forward)
D = 16          # embedding dim
C = 5           # number of output classes
Co = 8          # kernel_num (channels per conv branch)
Ks = (3, 4, 5)  # kernel sizes
N = 2           # batch
W = 16          # sequence length

LANE = 128      # vreg lane width: tap blocks & FC dims padded to this


# ------------------------------ Pallas kernel ------------------------------
def _make_kernel(tn, w_len, ks, bc_pad):
    kmax = max(ks)
    rows = tn * w_len            # flattened (batch_block * seq) rows

    def kernel(x_ref, wc_ref, wfc_ref, bm_ref, out_ref):
        # One bf16 MXU matmul for ALL branches and ALL taps:
        #   y[r, k*bc_pad + i*Co + ch] = sum_d x[r, d] * W_i[k, d, ch]
        x_bf = x_ref[...].astype(jnp.bfloat16)                  # (rows, D)
        y = jnp.dot(x_bf, wc_ref[...],
                    preferred_element_type=jnp.float32)         # (rows, kmax*bc_pad)

        # Combine the kmax time shifts with circular sublane rolls (XLU):
        #   acc[r, :] = sum_k y[(r + k) mod rows, tap-k block]
        # Wrapped rows are neutralized by the zero tap-k columns (k >= K_i)
        # or by the pre-pool mask (t >= T_i), so this is exact.
        acc = y[:, 0:bc_pad]
        for k in range(1, kmax):
            yk = y[:, k * bc_pad:(k + 1) * bc_pad]               # lane-aligned
            acc = acc + pltpu.roll(yk, shift=rows - k, axis=0)

        # conv bias (row 0 of the packed bias/mask array) + ReLU, f32.
        z = jnp.maximum(acc + bm_ref[0:1, :], 0.0)               # (rows, bc_pad)

        # Static validity mask (rows 2.. of the packed array): zero positions
        # t >= W - K_i + 1 and the lane-pad columns.  ReLU output >= 0, so
        # zeroing keeps the global max exact.
        mask = bm_ref[2:2 + w_len, :]                            # (w_len, bc_pad)
        z3 = z.reshape(tn, w_len, bc_pad) * mask.reshape(1, w_len, bc_pad)

        # global max-pool over time -> (tn, bc_pad), already branch-major.
        pooled = jnp.max(z3, axis=1)

        # FC: bf16 MXU matmul; fc bias is row 1 of the packed array.
        logit = jnp.dot(pooled.astype(jnp.bfloat16), wfc_ref[...],
                        preferred_element_type=jnp.float32)      # (tn, c_pad)
        out_ref[...] = logit + bm_ref[1:2, :]                    # lane-dense store

    return kernel


# ------------------------------ param packing ------------------------------
def _pack_params(conv_ws, conv_bs, wfc, bfc, w_len):
    nb = len(conv_ws)
    co = conv_ws[0].shape[-1]
    d = conv_ws[0].shape[1]
    c = wfc.shape[-1]
    bc = nb * co
    bc_pad = LANE
    c_pad = LANE
    ks = tuple(int(w.shape[0]) for w in conv_ws)
    kmax = max(ks)

    # Conv weights, tap-major; each tap's column block padded to 128 lanes so
    # in-kernel tap slices are whole-vreg.  Taps k >= K_i are zero columns.
    wc = np.zeros((d, kmax * bc_pad), np.float32)
    for i, w in enumerate(conv_ws):                       # w: (K_i, D, Co)
        wnp = np.asarray(w, np.float32)
        for k in range(ks[i]):
            wc[:, k * bc_pad + i * co:k * bc_pad + (i + 1) * co] = wnp[k]
    wc = jnp.asarray(wc, jnp.bfloat16)                    # bf16 once, in wrapper

    # FC weights padded to (128, 128) with zero rows/cols (pad lanes of the
    # pooled features are zero anyway, so nothing leaks into the logits).
    wfc_pad = np.zeros((bc_pad, c_pad), np.float32)
    wfc_pad[:bc, :c] = np.asarray(wfc, np.float32)
    wfc_pad = jnp.asarray(wfc_pad, jnp.bfloat16)

    # Biases + static time-validity mask packed into one f32 array (one DMA):
    #   row 0          : conv biases (branch-major, zero in pad lanes)
    #   row 1          : fc bias (first C lanes)
    #   rows 2..2+W-1  : mask[t, col] = 1 iff col < bc and t < W - K_i + 1
    bm = np.zeros((2 + w_len, bc_pad), np.float32)
    bm[0, :bc] = np.concatenate(
        [np.asarray(b, np.float32).reshape(co) for b in conv_bs])
    bm[1, :c] = np.asarray(bfc, np.float32).reshape(c)
    for i, K in enumerate(ks):
        bm[2:2 + (w_len - K + 1), i * co:(i + 1) * co] = 1.0
    bm = jnp.asarray(bm)

    return wc, wfc_pad, bm


# --------------------------------- wrapper ----------------------------------
def cnn_hems_forward(x, conv_ws, conv_bs, wfc, bfc):
    n, w_len, d = x.shape
    c = wfc.shape[-1]
    ks = tuple(int(w.shape[0]) for w in conv_ws)
    bc_pad = LANE
    c_pad = LANE
    kmax = max(ks)

    wc, wfc_pad, bm = _pack_params(conv_ws, conv_bs, wfc, bfc, w_len)
    x_flat = x.reshape(n * w_len, d)       # layout once; no in-kernel x reshapes

    # Demo: single batch block (grid=(1,)).  For real workloads choose tn as
    # a multiple of 8 with tn*W >= 256-512 (fills the MXU M dim), tn <= N/2
    # so both v7x TensorCores get work on the "parallel" axis, and cap tn /
    # set vmem_limit_bytes against v7x's 32 MiB (v5e 16 MiB) scoped defaults.
    tn = n
    grid = (n // tn,)
    rows = tn * w_len

    kernel = _make_kernel(tn, w_len, ks, bc_pad)

    out_pad = pl.pallas_call(
        kernel,
        out_shape=jax.ShapeDtypeStruct((n, c_pad), jnp.float32),
        grid=grid,
        in_specs=[
            pl.BlockSpec((rows, d), lambda i: (i, 0)),           # x block (f32)
            pl.BlockSpec((d, kmax * bc_pad), lambda i: (0, 0)),  # packed conv W (bf16)
            pl.BlockSpec((bc_pad, c_pad), lambda i: (0, 0)),     # padded fc W (bf16)
            pl.BlockSpec((2 + w_len, bc_pad), lambda i: (0, 0)),  # biases + mask (f32)
        ],
        out_specs=pl.BlockSpec((tn, c_pad), lambda i: (i, 0)),
        compiler_params=pltpu.CompilerParams(
            dimension_semantics=("parallel",)),
    )(x_flat, wc, wfc_pad, bm)

    return out_pad[:, :c]                  # drop lane padding of the logits


# --------------------------- pure-JAX reference -----------------------------
def cnn_hems_reference(x, conv_ws, conv_bs, wfc, bfc):
    n, w_len, d = x.shape
    feats = []
    for wk, bk in zip(conv_ws, conv_bs):
        K = wk.shape[0]
        T = w_len - K + 1
        acc = jnp.zeros((n, T, wk.shape[-1]), jnp.float32)
        for k in range(K):
            acc = acc + jnp.einsum('ntd,dc->ntc', x[:, k:k + T, :], wk[k])
        y = jnp.maximum(acc + bk, 0.0)
        feats.append(jnp.max(y, axis=1))
    f = jnp.concatenate(feats, axis=1)
    return f @ wfc + bfc


# --------------------------------- main -------------------------------------
if __name__ == "__main__":
    key = jax.random.PRNGKey(0)
    keys = jax.random.split(key, 2 * len(Ks) + 3)

    # deterministic parameter init (synthetic — not a checkpoint load)
    conv_ws = []
    conv_bs = []
    for i, K in enumerate(Ks):
        conv_ws.append(0.1 * jax.random.normal(keys[2 * i], (K, D, Co),
                                               dtype=jnp.float32))
        conv_bs.append(0.1 * jax.random.normal(keys[2 * i + 1], (1, Co),
                                               dtype=jnp.float32))
    wfc = 0.1 * jax.random.normal(keys[-3], (len(Ks) * Co, C),
                                  dtype=jnp.float32)
    bfc = 0.1 * jax.random.normal(keys[-2], (1, C), dtype=jnp.float32)

    # example input: already-embedded sequence (N, W, D)
    # (self.embed is defined in __init__ but never called in forward)
    x = jax.random.normal(keys[-1], (N, W, D), dtype=jnp.float32)

    out = cnn_hems_forward(x, conv_ws, conv_bs, wfc, bfc)
    out = jax.block_until_ready(out)

    ref = cnn_hems_reference(x, conv_ws, conv_bs, wfc, bfc)
    assert out.shape == (N, C)
    # bf16 MXU operands with f32 accumulation -> ~1e-2 relative tolerance
    assert jnp.allclose(out, ref, atol=2e-2, rtol=2e-2), "mismatch vs reference"

    print("KERNEL_OK")
</pallas_src>

<mosaic_0001>
module attributes {stable_mosaic.version = 11 : i64} {
  func.func @kernel(%arg0: i32, %arg1: memref<32x16xf32, #tpu.memory_space<vmem>>, %arg2: memref<16x640xbf16, #tpu.memory_space<vmem>>, %arg3: memref<128x128xbf16, #tpu.memory_space<vmem>>, %arg4: memref<18x128xf32, #tpu.memory_space<vmem>>, %arg5: memref<2x128xf32, #tpu.memory_space<vmem>>) attributes {dimension_semantics = [#tpu.dimension_semantics<parallel>], iteration_bounds = array<i64: 1>, scalar_prefetch = 0 : i64, scratch_operands = 0 : i64, tpu.core_type = #tpu.core_type<tc>, window_params = [{transform_indices = @transform_0, window_bounds = array<i64: 32, 16>}, {pipeline_mode = #tpu.pipeline_mode<synchronous>, transform_indices = @transform_1, window_bounds = array<i64: 16, 640>}, {pipeline_mode = #tpu.pipeline_mode<synchronous>, transform_indices = @transform_2, window_bounds = array<i64: 128, 128>}, {pipeline_mode = #tpu.pipeline_mode<synchronous>, transform_indices = @transform_3, window_bounds = array<i64: 18, 128>}, {transform_indices = @transform_4, window_bounds = array<i64: 2, 128>}]} {
    %c0 = arith.constant 0 : index
    %c0_0 = arith.constant 0 : index
    %0 = vector.load %arg1[%c0, %c0_0] : memref<32x16xf32, #tpu.memory_space<vmem>>, vector<32x16xf32>
    %1 = arith.truncf %0 : vector<32x16xf32> to vector<32x16xbf16>
    %c0_1 = arith.constant 0 : index
    %c0_2 = arith.constant 0 : index
    %2 = vector.load %arg2[%c0_1, %c0_2] : memref<16x640xbf16, #tpu.memory_space<vmem>>, vector<16x640xbf16>
    %cst = arith.constant dense<0.000000e+00> : vector<32x640xf32>
    %3 = tpu.matmul %1, %2, %cst {dimension_numbers = #tpu.dot_dimension_numbers<[1], [0], [0], [1], [0, 0, 1, 1], [], []>} : vector<32x16xbf16>, vector<16x640xbf16>, vector<32x640xf32> -> vector<32x640xf32>
    %4 = vector.extract_strided_slice %3 {offsets = [0, 0], sizes = [32, 128], strides = [1, 1]} : vector<32x640xf32> to vector<32x128xf32>
    %5 = vector.extract_strided_slice %3 {offsets = [0, 128], sizes = [32, 128], strides = [1, 1]} : vector<32x640xf32> to vector<32x128xf32>
    %c31_i32 = arith.constant 31 : i32
    %6 = tpu.dynamic_rotate %5 by %c31_i32 dim 0 : vector<32x128xf32>, i32 -> vector<32x128xf32>
    %7 = arith.addf %4, %6 : vector<32x128xf32>
    %8 = vector.extract_strided_slice %3 {offsets = [0, 256], sizes = [32, 128], strides = [1, 1]} : vector<32x640xf32> to vector<32x128xf32>
    %c30_i32 = arith.constant 30 : i32
    %9 = tpu.dynamic_rotate %8 by %c30_i32 dim 0 : vector<32x128xf32>, i32 -> vector<32x128xf32>
    %10 = arith.addf %7, %9 : vector<32x128xf32>
    %11 = vector.extract_strided_slice %3 {offsets = [0, 384], sizes = [32, 128], strides = [1, 1]} : vector<32x640xf32> to vector<32x128xf32>
    %c29_i32 = arith.constant 29 : i32
    %12 = tpu.dynamic_rotate %11 by %c29_i32 dim 0 : vector<32x128xf32>, i32 -> vector<32x128xf32>
    %13 = arith.addf %10, %12 : vector<32x128xf32>
    %14 = vector.extract_strided_slice %3 {offsets = [0, 512], sizes = [32, 128], strides = [1, 1]} : vector<32x640xf32> to vector<32x128xf32>
    %c28_i32 = arith.constant 28 : i32
    %15 = tpu.dynamic_rotate %14 by %c28_i32 dim 0 : vector<32x128xf32>, i32 -> vector<32x128xf32>
    %16 = arith.addf %13, %15 : vector<32x128xf32>
    %c0_3 = arith.constant 0 : index
    %c0_4 = arith.constant 0 : index
    %17 = vector.load %arg4[%c0_3, %c0_4] : memref<18x128xf32, #tpu.memory_space<vmem>>, vector<1x128xf32>
    %18 = vector.broadcast %17 : vector<1x128xf32> to vector<32x128xf32>
    %19 = arith.addf %16, %18 : vector<32x128xf32>
    %cst_5 = arith.constant 0.000000e+00 : f32
    %20 = vector.broadcast %cst_5 : f32 to vector<32x128xf32>
    %21 = arith.maximumf %19, %20 : vector<32x128xf32>
    %c2 = arith.constant 2 : index
    %c0_6 = arith.constant 0 : index
    %22 = vector.load %arg4[%c2, %c0_6] : memref<18x128xf32, #tpu.memory_space<vmem>>, vector<16x128xf32>
    %23 = vector.shape_cast %21 : vector<32x128xf32> to vector<2x16x128xf32>
    %24 = vector.shape_cast %22 : vector<16x128xf32> to vector<1x16x128xf32>
    %25 = vector.broadcast %24 : vector<1x16x128xf32> to vector<2x16x128xf32>
    %26 = arith.mulf %23, %25 : vector<2x16x128xf32>
    %cst_7 = arith.constant dense<0xFF800000> : vector<2x128xf32>
    %27 = vector.multi_reduction <maximumf>, %26, %cst_7 [1] : vector<2x16x128xf32> to vector<2x128xf32>
    %28 = arith.truncf %27 : vector<2x128xf32> to vector<2x128xbf16>
    %c0_8 = arith.constant 0 : index
    %c0_9 = arith.constant 0 : index
    %29 = vector.load %arg3[%c0_8, %c0_9] : memref<128x128xbf16, #tpu.memory_space<vmem>>, vector<128x128xbf16>
    %cst_10 = arith.constant dense<0.000000e+00> : vector<2x128xf32>
    %30 = tpu.matmul %28, %29, %cst_10 {dimension_numbers = #tpu.dot_dimension_numbers<[1], [0], [0], [1], [0, 0, 1, 1], [], []>} : vector<2x128xbf16>, vector<128x128xbf16>, vector<2x128xf32> -> vector<2x128xf32>
    %c1 = arith.constant 1 : index
    %c0_11 = arith.constant 0 : index
    %31 = vector.load %arg4[%c1, %c0_11] : memref<18x128xf32, #tpu.memory_space<vmem>>, vector<1x128xf32>
    %32 = vector.broadcast %31 : vector<1x128xf32> to vector<2x128xf32>
    %33 = arith.addf %30, %32 : vector<2x128xf32>
    %c0_12 = arith.constant 0 : index
    %c0_13 = arith.constant 0 : index
    %34 = vector.load %arg5[%c0_12, %c0_13] : memref<2x128xf32, #tpu.memory_space<vmem>>, vector<2x128xf32>
    tpu.vector_store %arg5[%c0_12, %c0_13], %33 {strides = array<i32>} : memref<2x128xf32, #tpu.memory_space<vmem>>, vector<2x128xf32>,
    return
  }
  func.func @transform_0(%arg0: i32) -> (i32, i32) {
    %c0_i32 = arith.constant 0 : i32
    %c0_i32_0 = arith.constant 0 : i32
    return %arg0, %c0_i32 : i32, i32
  }
  func.func @transform_1(%arg0: i32) -> (i32, i32) {
    %c0_i32 = arith.constant 0 : i32
    %c0_i32_0 = arith.constant 0 : i32
    %c0_i32_1 = arith.constant 0 : i32
    return %c0_i32, %c0_i32_0 : i32, i32
  }
  func.func @transform_2(%arg0: i32) -> (i32, i32) {
    %c0_i32 = arith.constant 0 : i32
    %c0_i32_0 = arith.constant 0 : i32
    %c0_i32_1 = arith.constant 0 : i32
    return %c0_i32, %c0_i32_0 : i32, i32
  }
  func.func @transform_3(%arg0: i32) -> (i32, i32) {
    %c0_i32 = arith.constant 0 : i32
    %c0_i32_0 = arith.constant 0 : i32
    %c0_i32_1 = arith.constant 0 : i32
    return %c0_i32, %c0_i32_0 : i32, i32
  }
  func.func @transform_4(%arg0: i32) -> (i32, i32) {
    %c0_i32 = arith.constant 0 : i32
    %c0_i32_0 = arith.constant 0 : i32
    return %arg0, %c0_i32 : i32, i32
  }
}

</mosaic_0001>

<llo_original>
// kernel: tpu_custom_call.1
$region0: #{tpu_custom_call.1}
  #allocation0 [shape = 'u32[]', space=smem, size = 0x4, offset = 0x4, fixed_abs, tag = 'smem constant byte address 0x4 - core index']
  #allocation1 [shape = 'u32[144,128]{1,0:T(1,128)}', space=vmem, size = 0x12000, scoped, tag = 'internal scratch']
  %s0 = inlined_call_operand.vmem [shape: f32[32,16], index: 0, kind: input, shape index: {}]
  %s1 = inlined_call_operand.vmem [shape: bf16[16,640], index: 1, kind: input, shape index: {}]
  %s2 = inlined_call_operand.hbm [shape: bf16[128,128], index: 2, kind: input, shape index: {}]
  %s3 = inlined_call_operand.hbm [shape: f32[18,128], index: 3, kind: input, shape index: {}]
  %s4 = inlined_call_operand.hbm [shape: f32[2,128], index: 4, kind: output, shape index: {}]
  %s5 = sld [smem:[#allocation0]]
  $region34: #{tpu_custom_call.1} parent=0
    _
  %s7 = ssub.s32 1, %s5
  %s8 = scalar_select 0, %s7, %s5
  $region1: #{tpu_custom_call.1} parent=0
    #allocation2 [shape = 'u8[32768]{0}', space=vmem, size = 0x8000, scoped, tag = 'input window, operand 2, single buffered']
    #allocation3 [shape = 's32[1]{0}', space=sflag, size = 0x4, scoped, tag = 'scoped memory for tpu_custom_call.1']
    #allocation4 [shape = 's32[1]{0}', space=sflag, size = 0x4, scoped, tag = 'scoped memory for tpu_custom_call.1']
    #allocation5 [shape = 'u8[12288]{0}', space=vmem, size = 0x3000, scoped, tag = 'input window, operand 3, single buffered']
    #allocation6 [shape = 's32[1]{0}', space=sflag, size = 0x4, scoped, tag = 'scoped memory for tpu_custom_call.1']
    #allocation7 [shape = 'u8[1024]{0}', space=vmem, size = 0x400, scoped, tag = 'output window, operand 0, single buffered']
    %9 = vsyncpa [#allocation3], 0
    %10 = vsyncpa [#allocation6], 0
    %11 = vsyncpa [#allocation4], 0
    // Predicated region
    $region2: #{tpu_custom_call.1} parent=1 // pred_check
      _
    $region3: #{tpu_custom_call.1} parent=1 // pred_check_branch
      %13 = sbr.rel (0) target = $region5
    $region4: #{tpu_custom_call.1} parent=1 // pred_region
      _
    $region5: #{tpu_custom_call.1} parent=1 // pred_fallthru
      _
    // Predicated region
    $region6: #{tpu_custom_call.1} parent=1 // pred_check
      _
    $region7: #{tpu_custom_call.1} parent=1 // pred_check_branch
      %15 = sbr.rel (0) target = $region9
    $region8: #{tpu_custom_call.1} parent=1 // pred_region
      _
    $region9: #{tpu_custom_call.1} parent=1 // pred_fallthru
      _
    // Predicated region
    $region10: #{tpu_custom_call.1} parent=1 // pred_check
      _
    $region11: #{tpu_custom_call.1} parent=1 // pred_check_branch
      %17 = sbr.rel (0) target = $region13
    $region12: #{tpu_custom_call.1} parent=1 // pred_region
      %s19 = ssub.s32 1024, 1024
      %20 = vsyncadd [#allocation3], %s19
      %s21 = sshll.u32 [#allocation2], 4
      %s22 = int_to_ptr.vmem [resolvable:$true] %s21
      %27 = dma.hbm_to_vmem [thread:$0]  %s2, 1024, %s22, [#allocation3], 64, 64, 4
    $region13: #{tpu_custom_call.1} parent=1 // pred_fallthru
      _
    // Predicated region
    $region14: #{tpu_custom_call.1} parent=1 // pred_check
      _
    $region15: #{tpu_custom_call.1} parent=1 // pred_check_branch
      %29 = sbr.rel (0) target = $region17
    $region16: #{tpu_custom_call.1} parent=1 // pred_region
      %s31 = ssub.s32 384, 384
      %32 = vsyncadd [#allocation6], %s31
      %s33 = sshll.u32 [#allocation5], 4
      %s34 = int_to_ptr.vmem [resolvable:$true] %s33
      %39 = dma.hbm_to_vmem [thread:$0]  %s3, 384, %s34, [#allocation6], 128, 128, 8
    $region17: #{tpu_custom_call.1} parent=1 // pred_fallthru
      _
    // Predicated region
    $region18: #{tpu_custom_call.1} parent=1 // pred_check
      _
    $region19: #{tpu_custom_call.1} parent=1 // pred_check_branch
      %41 = sbr.rel (0) target = $region21
    $region20: #{tpu_custom_call.1} parent=1 // pred_region
      %42 = dma.done [#allocation3], 1024
    $region21: #{tpu_custom_call.1} parent=1 // pred_fallthru
      _
    // Predicated region
    $region22: #{tpu_custom_call.1} parent=1 // pred_check
      _
    $region23: #{tpu_custom_call.1} parent=1 // pred_check_branch
      %44 = sbr.rel (0) target = $region25
    $region24: #{tpu_custom_call.1} parent=1 // pred_region
      %45 = dma.done [#allocation6], 384
    $region25: #{tpu_custom_call.1} parent=1 // pred_fallthru
      _
    %v47 = vld [vmem:[%s0] sm:$0xff]
    %v48 = vld [vmem:[%s0 + $0x8] sm:$0xff]
    %v49 = vld [vmem:[%s0 + $0x10] sm:$0xff]
    %v50 = vld [vmem:[%s0 + $0x18] sm:$0xff]
    %v51 = vpack.c.bf16 %v48, %v47
    %v52 = vpack.c.bf16 %v50, %v49
    %v53 = vld [vmem:[%s1] sm:$0xff]
    %v54 = vld [vmem:[%s1 + $0x8] sm:$0xff]
    %v55 = vld [vmem:[%s1 + $0x10] sm:$0xf]
    %v56 = vld [vmem:[%s1 + $0x14] sm:$0xff]
    %v57 = vld [vmem:[%s1 + $0x1c] sm:$0xff]
    %v58 = vld [vmem:[%s1 + $0x24] sm:$0xf]
    %v65 = vunpack.c.l.b16 %v53
    %v66 = vunpack.c.h.b16 %v53
    %v67 = vunpack.c.l.b16 %v54
    %v68 = vunpack.c.h.b16 %v54
    %v69 = vunpack.c.l.b16 %v55
    %v70 = vunpack.c.l.b16 %v56
    %v71 = vunpack.c.h.b16 %v56
    %v72 = vunpack.c.l.b16 %v57
    %v73 = vunpack.c.h.b16 %v57
    %v74 = vunpack.c.l.b16 %v58
    %v75 = vpack.c.b16 %v70, %v65
    %v76 = vpack.c.b16 %v71, %v66
    %v77 = vpack.c.b16 %v72, %v67
    %v78 = vpack.c.b16 %v73, %v68
    %v79 = vpack.c.b16 %v74, %v69
    %vm85 = vcmask 130048
    %v87 = vsel %vm85, %v51, 0
    %v90 = vsel %vm85, %v52, 0
    %92 = vmatprep.subr.bf16.mxu0 0
    %93 = vmatpush1.bf16.msra.mxu0 0
    %94 = vmatprep.subr.bf16.mxu0 0
    %95 = vmatpush1.bf16.msra.mxu0 0
    %96 = vmatprep.subr.bf16.mxu0 0
    %97 = vmatpush1.bf16.msra.mxu0 0
    %98 = vmatprep.subr.bf16.mxu0 0
    %99 = vmatpush1.bf16.msra.mxu0 0
    %100 = vmatprep.subr.bf16.mxu0 0
    %101 = vmatpush1.bf16.msra.mxu0 0
    %102 = vmatprep.subr.bf16.mxu0 0
    %103 = vmatpush1.bf16.msra.mxu0 0
    %104 = vmatprep.subr.bf16.mxu0 0
    %105 = vmatpush1.bf16.msra.mxu0 0
    %106 = vmatprep.subr.bf16.mxu0 %v76
    %107 = vmatpush1.bf16.msra.mxu0 %v75
    %108 = vmatprep.subr.bf16.mxu0 0
    %109 = vmatpush2.bf16.msra.mxu0 0
    %110 = vmatprep.subr.bf16.mxu0 0
    %111 = vmatpush2.bf16.msra.mxu0 0
    %112 = vmatprep.subr.bf16.mxu0 0
    %113 = vmatpush2.bf16.msra.mxu0 0
    %114 = vmatprep.subr.bf16.mxu0 0
    %115 = vmatpush2.bf16.msra.mxu0 0
    %116 = vmatprep.subr.bf16.mxu0 0
    %117 = vmatpush2.bf16.msra.mxu0 0
    %118 = vmatprep.subr.bf16.mxu0 0
    %119 = vmatpush2.bf16.msra.mxu0 0
    %120 = vmatprep.subr.bf16.mxu0 0
    %121 = vmatpush2.bf16.msra.mxu0 0
    %122 = vmatprep.subr.bf16.mxu0 0
    %123 = vmatpush2.bf16.msra.mxu0 0
    %124 = vmatprep.mubr.bf16.mxu0 0
    %125 = vmatmul.mubr.bf16.gmra.mxu0 %v87
    %v126 = vpop.f32.mrf.mxu0
    %v127 = vadd.f32 0.0, %v126
    %v128 = vpop.f32.mrf.mxu0
    %v129 = vadd.f32 0.0, %v128
    %v130 = vpop.f32.mrf.mxu0
    %v131 = vadd.f32 0.0, %v130
    %v132 = vpop.f32.mrf.mxu0
    %v133 = vadd.f32 0.0, %v132
    %134 = vmatprep.mubr.bf16.mxu0 0
    %135 = vmatmul.mubr.bf16.gmra.mxu0 %v90
    %v136 = vpop.f32.mrf.mxu0
    %v137 = vadd.f32 0.0, %v136
    %v138 = vpop.f32.mrf.mxu0
    %v139 = vadd.f32 0.0, %v138
    %v140 = vpop.f32.mrf.mxu0
    %v141 = vadd.f32 0.0, %v140
    %v142 = vpop.f32.mrf.mxu0
    %v143 = vadd.f32 0.0, %v142
    %144 = vdwg.mxu0
    %145 = vmatprep.subr.bf16.mxu0 0
    %146 = vmatpush1.bf16.msra.mxu0 0
    %147 = vmatprep.subr.bf16.mxu0 0
    %148 = vmatpush1.bf16.msra.mxu0 0
    %149 = vmatprep.subr.bf16.mxu0 0
    %150 = vmatpush1.bf16.msra.mxu0 0
    %151 = vmatprep.subr.bf16.mxu0 0
    %152 = vmatpush1.bf16.msra.mxu0 0
    %153 = vmatprep.subr.bf16.mxu0 0
    %154 = vmatpush1.bf16.msra.mxu0 0
    %155 = vmatprep.subr.bf16.mxu0 0
    %156 = vmatpush1.bf16.msra.mxu0 0
    %157 = vmatprep.subr.bf16.mxu0 0
    %158 = vmatpush1.bf16.msra.mxu0 0
    %159 = vmatprep.subr.bf16.mxu0 %v78
    %160 = vmatpush1.bf16.msra.mxu0 %v77
    %161 = vmatprep.subr.bf16.mxu0 0
    %162 = vmatpush2.bf16.msra.mxu0 0
    %163 = vmatprep.subr.bf16.mxu0 0
    %164 = vmatpush2.bf16.msra.mxu0 0
    %165 = vmatprep.subr.bf16.mxu0 0
    %166 = vmatpush2.bf16.msra.mxu0 0
    %167 = vmatprep.subr.bf16.mxu0 0
    %168 = vmatpush2.bf16.msra.mxu0 0
    %169 = vmatprep.subr.bf16.mxu0 0
    %170 = vmatpush2.bf16.msra.mxu0 0
    %171 = vmatprep.subr.bf16.mxu0 0
    %172 = vmatpush2.bf16.msra.mxu0 0
    %173 = vmatprep.subr.bf16.mxu0 0
    %174 = vmatpush2.bf16.msra.mxu0 0
    %175 = vmatprep.subr.bf16.mxu0 0
    %176 = vmatpush2.bf16.msra.mxu0 0
    %177 = vmatprep.mubr.bf16.mxu0 0
    %178 = vmatmul.mubr.bf16.gmra.mxu0 %v87
    %v179 = vpop.f32.mrf.mxu0
    %v180 = vadd.f32 0.0, %v179
    %v181 = vpop.f32.mrf.mxu0
    %v182 = vadd.f32 0.0, %v181
    %v183 = vpop.f32.mrf.mxu0
    %v184 = vadd.f32 0.0, %v183
    %v185 = vpop.f32.mrf.mxu0
    %v186 = vadd.f32 0.0, %v185
    %187 = vmatprep.mubr.bf16.mxu0 0
    %188 = vmatmul.mubr.bf16.gmra.mxu0 %v90
    %v189 = vpop.f32.mrf.mxu0
    %v190 = vadd.f32 0.0, %v189
    %v191 = vpop.f32.mrf.mxu0
    %v192 = vadd.f32 0.0, %v191
    %v193 = vpop.f32.mrf.mxu0
    %v194 = vadd.f32 0.0, %v193
    %v195 = vpop.f32.mrf.mxu0
    %v196 = vadd.f32 0.0, %v195
    %197 = vdwg.mxu0
    %198 = vmatprep.subr.bf16.mxu0 0
    %199 = vmatpush1.bf16.msra.mxu0 0
    %200 = vmatprep.subr.bf16.mxu0 0
    %201 = vmatpush1.bf16.msra.mxu0 0
    %202 = vmatprep.subr.bf16.mxu0 0
    %203 = vmatpush1.bf16.msra.mxu0 0
    %204 = vmatprep.subr.bf16.mxu0 0
    %205 = vmatpush1.bf16.msra.mxu0 0
    %206 = vmatprep.subr.bf16.mxu0 0
    %207 = vmatpush1.bf16.msra.mxu0 0
    %208 = vmatprep.subr.bf16.mxu0 0
    %209 = vmatpush1.bf16.msra.mxu0 0
    %210 = vmatprep.subr.bf16.mxu0 0
    %211 = vmatpush1.bf16.msra.mxu0 0
    %212 = vmatprep.subr.bf16.mxu0 0
    %213 = vmatpush1.bf16.msra.mxu0 %v79
    %214 = vmatprep.subr.bf16.mxu0 0
    %215 = vmatpush2.bf16.msra.mxu0 0
    %216 = vmatprep.subr.bf16.mxu0 0
    %217 = vmatpush2.bf16.msra.mxu0 0
    %218 = vmatprep.subr.bf16.mxu0 0
    %219 = vmatpush2.bf16.msra.mxu0 0
    %220 = vmatprep.subr.bf16.mxu0 0
    %221 = vmatpush2.bf16.msra.mxu0 0
    %222 = vmatprep.subr.bf16.mxu0 0
    %223 = vmatpush2.bf16.msra.mxu0 0
    %224 = vmatprep.subr.bf16.mxu0 0
    %225 = vmatpush2.bf16.msra.mxu0 0
    %226 = vmatprep.subr.bf16.mxu0 0
    %227 = vmatpush2.bf16.msra.mxu0 0
    %228 = vmatprep.subr.bf16.mxu0 0
    %229 = vmatpush2.bf16.msra.mxu0 0
    %230 = vmatprep.mubr.bf16.mxu0 0
    %231 = vmatmul.mubr.bf16.gmra.mxu0 %v87
    %v232 = vpop.f32.mrf.mxu0
    %v233 = vadd.f32 0.0, %v232
    %v234 = vpop.f32.mrf.mxu0
    %v235 = vpop.f32.mrf.mxu0
    %v236 = vadd.f32 0.0, %v235
    %v237 = vpop.f32.mrf.mxu0
    %238 = vmatprep.mubr.bf16.mxu0 0
    %239 = vmatmul.mubr.bf16.gmra.mxu0 %v90
    %v240 = vpop.f32.mrf.mxu0
    %v241 = vadd.f32 0.0, %v240
    %v242 = vpop.f32.mrf.mxu0
    %v243 = vpop.f32.mrf.mxu0
    %v244 = vadd.f32 0.0, %v243
    %v245 = vpop.f32.mrf.mxu0
    %246 = vdwg.mxu0
    %v247 = vrot.slane %v129, 1
    %v248 = vrot.slane %v133, 1
    %v249 = vrot.slane %v139, 1
    %v250 = vrot.slane %v143, 1
    %v251 = vlaneseq
    %v252 = vshrl.u32 %v251, 7
    %vm253 = vcmp.lt.s32.totalorder %v252, 7
    %v254 = vsel %vm253, %v249, %v250
    %v255 = vsel %vm253, %v248, %v249
    %v256 = vsel %vm253, %v247, %v248
    %v257 = vsel %vm253, %v250, %v247
    %v258 = vadd.f32 %v127, %v256
    %v259 = vadd.f32 %v131, %v255
    %v260 = vadd.f32 %v137, %v254
    %v261 = vadd.f32 %v141, %v257
    %v262 = vrot.slane %v180, 2
    %v263 = vrot.slane %v184, 2
    %v264 = vrot.slane %v190, 2
    %v265 = vrot.slane %v194, 2
    %vm266 = vcmp.lt.s32.totalorder %v252, 6
    %v267 = vsel %vm266, %v264, %v265
    %v268 = vsel %vm266, %v263, %v264
    %v269 = vsel %vm266, %v262, %v263
    %v270 = vsel %vm266, %v265, %v262
    %v271 = vadd.f32 %v258, %v269
    %v272 = vadd.f32 %v259, %v268
    %v273 = vadd.f32 %v260, %v267
    %v274 = vadd.f32 %v261, %v270
    %v275 = vrot.slane %v182, 3
    %v276 = vrot.slane %v186, 3
    %v277 = vrot.slane %v192, 3
    %v278 = vrot.slane %v196, 3
    %vm279 = vcmp.lt.s32.totalorder %v252, 5
    %v280 = vsel %vm279, %v277, %v278
    %v281 = vsel %vm279, %v276, %v277
    %v282 = vsel %vm279, %v275, %v276
    %v283 = vsel %vm279, %v278, %v275
    %v284 = vadd.f32 %v271, %v282
    %v285 = vadd.f32 %v272, %v281
    %v286 = vadd.f32 %v273, %v280
    %v287 = vadd.f32 %v274, %v283
    %v288 = vrot.slane %v233, 4
    %v289 = vrot.slane %v236, 4
    %v290 = vrot.slane %v241, 4
    %v291 = vrot.slane %v244, 4
    %vm292 = vcmp.lt.s32.totalorder %v252, 4
    %v293 = vsel %vm292, %v290, %v291
    %v294 = vsel %vm292, %v289, %v290
    %v295 = vsel %vm292, %v288, %v289
    %v296 = vsel %vm292, %v291, %v288
    %v297 = vadd.f32 %v284, %v295
    %v298 = vadd.f32 %v285, %v294
    %v299 = vadd.f32 %v286, %v293
    %v300 = vadd.f32 %v287, %v296
    %v301 = vld [vmem:[#allocation5] sm:$0x1]
    %v302 = vlaneseq
    %v303 = vshrl.u32 %v302, 7
    %v304 = vsub.s32 0, %v303
    %v305 = vrot.slane %v301, %v304
    %v306 = vadd.f32 %v297, %v305
    %v307 = vadd.f32 %v298, %v305
    %v308 = vadd.f32 %v299, %v305
    %v309 = vadd.f32 %v300, %v305
    %v310 = vmax.f32 %v306, 0.0
    %v311 = vmax.f32 %v307, 0.0
    %v312 = vmax.f32 %v308, 0.0
    %v313 = vmax.f32 %v309, 0.0
    %v314 = vld [vmem:[#allocation5 + $0x2] sm:$0xff]
    %v315 = vld [vmem:[#allocation5 + $0xa] sm:$0xff]
    %v316 = vmul.f32 %v310, %v314
    %v317 = vmul.f32 %v311, %v315
    %v318 = vmul.f32 %v312, %v314
    %v319 = vmul.f32 %v313, %v315
    %v320 = vmax.f32 %v316, %v317
    %v321 = vrot.slane %v320, 4
    %v322 = vmax.f32 %v320, %v321
    %v323 = vrot.slane %v322, 2
    %v324 = vmax.f32 %v322, %v323
    %v325 = vrot.slane %v324, 1
    %v326 = vmax.f32 %v324, %v325
    %v327 = vmax.f32 %v318, %v319
    %v328 = vrot.slane %v327, 4
    %v329 = vmax.f32 %v327, %v328
    %v330 = vrot.slane %v329, 2
    %v331 = vmax.f32 %v329, %v330
    %v332 = vrot.slane %v331, 1
    %v333 = vmax.f32 %v331, %v332
    %v334 = vpack.c.bf16 %v326, %v326
    %v335 = vpack.c.bf16 %v333, %v333
    %v336 = vld [vmem:[#allocation2] sm:$0xf]
    %v337 = vld [vmem:[#allocation2 + $0x4] sm:$0xf]
    %v338 = vld [vmem:[#allocation2 + $0x8] sm:$0xf]
    %v339 = vld [vmem:[#allocation2 + $0xc] sm:$0xf]
    %v340 = vld [vmem:[#allocation2 + $0x10] sm:$0xf]
    %v341 = vld [vmem:[#allocation2 + $0x14] sm:$0xf]
    %v342 = vld [vmem:[#allocation2 + $0x18] sm:$0xf]
    %v343 = vld [vmem:[#allocation2 + $0x1c] sm:$0xf]
    %v344 = vld [vmem:[#allocation2 + $0x20] sm:$0xf]
    %v345 = vld [vmem:[#allocation2 + $0x24] sm:$0xf]
    %v346 = vld [vmem:[#allocation2 + $0x28] sm:$0xf]
    %v347 = vld [vmem:[#allocation2 + $0x2c] sm:$0xf]
    %v348 = vld [vmem:[#allocation2 + $0x30] sm:$0xf]
    %v349 = vld [vmem:[#allocation2 + $0x34] sm:$0xf]
    %v350 = vld [vmem:[#allocation2 + $0x38] sm:$0xf]
    %v351 = vld [vmem:[#allocation2 + $0x3c] sm:$0xf]
    %v352 = vld [vmem:[#allocation5 + $0x1] sm:$0x1]
    %v353 = vlaneseq
    %v354 = vshrl.u32 %v353, 7
    %v355 = vsub.s32 0, %v354
    %v356 = vrot.slane %v352, %v355
    %v359 = vunpack.c.l.b16 %v334
    %v360 = vunpack.c.l.b16 %v335
    %vm361 = vcmask 1041409
    %v362 = vsel %vm361, %v360, %v359
    %v363 = vpack.c.b16 %v362, %v362
    %v381 = vunpack.c.l.b16 %v336
    %v382 = vunpack.c.l.b16 %v337
    %v383 = vunpack.c.l.b16 %v338
    %v384 = vunpack.c.l.b16 %v339
    %v385 = vunpack.c.l.b16 %v340
    %v386 = vunpack.c.l.b16 %v341
    %v387 = vunpack.c.l.b16 %v342
    %v388 = vunpack.c.l.b16 %v343
    %v389 = vunpack.c.l.b16 %v344
    %v390 = vunpack.c.l.b16 %v345
    %v391 = vunpack.c.l.b16 %v346
    %v392 = vunpack.c.l.b16 %v347
    %v393 = vunpack.c.l.b16 %v348
    %v394 = vunpack.c.l.b16 %v349
    %v395 = vunpack.c.l.b16 %v350
    %v396 = vunpack.c.l.b16 %v351
    %v397 = vpack.c.b16 %v382, %v381
    %v398 = vpack.c.b16 %v384, %v383
    %v399 = vpack.c.b16 %v386, %v385
    %v400 = vpack.c.b16 %v388, %v387
    %v401 = vpack.c.b16 %v390, %v389
    %v402 = vpack.c.b16 %v392, %v391
    %v403 = vpack.c.b16 %v394, %v393
    %v404 = vpack.c.b16 %v396, %v395
    %413 = vmatprep.subr.bf16.mxu0 0
    %414 = vmatpush1.bf16.msra.mxu0 %v404
    %415 = vmatprep.subr.bf16.mxu0 0
    %416 = vmatpush1.bf16.msra.mxu0 %v403
    %417 = vmatprep.subr.bf16.mxu0 0
    %418 = vmatpush1.bf16.msra.mxu0 %v402
    %419 = vmatprep.subr.bf16.mxu0 0
    %420 = vmatpush1.bf16.msra.mxu0 %v401
    %421 = vmatprep.subr.bf16.mxu0 0
    %422 = vmatpush1.bf16.msra.mxu0 %v400
    %423 = vmatprep.subr.bf16.mxu0 0
    %424 = vmatpush1.bf16.msra.mxu0 %v399
    %425 = vmatprep.subr.bf16.mxu0 0
    %426 = vmatpush1.bf16.msra.mxu0 %v398
    %427 = vmatprep.subr.bf16.mxu0 0
    %428 = vmatpush1.bf16.msra.mxu0 %v397
    %429 = vmatprep.subr.bf16.mxu0 0
    %430 = vmatpush2.bf16.msra.mxu0 0
    %431 = vmatprep.subr.bf16.mxu0 0
    %432 = vmatpush2.bf16.msra.mxu0 0
    %433 = vmatprep.subr.bf16.mxu0 0
    %434 = vmatpush2.bf16.msra.mxu0 0
    %435 = vmatprep.subr.bf16.mxu0 0
    %436 = vmatpush2.bf16.msra.mxu0 0
    %437 = vmatprep.subr.bf16.mxu0 0
    %438 = vmatpush2.bf16.msra.mxu0 0
    %439 = vmatprep.subr.bf16.mxu0 0
    %440 = vmatpush2.bf16.msra.mxu0 0
    %441 = vmatprep.subr.bf16.mxu0 0
    %442 = vmatpush2.bf16.msra.mxu0 0
    %443 = vmatprep.subr.bf16.mxu0 0
    %444 = vmatpush2.bf16.msra.mxu0 0
    %445 = vmatprep.mubr.bf16.mxu0 0
    %446 = vmatmul.mubr.bf16.gmra.mxu0 %v363
    %v447 = vpop.f32.mrf.mxu0
    %v448 = vadd.f32 %v356, %v447
    %v449 = vpop.f32.mrf.mxu0
    %v450 = vpop.f32.mrf.mxu0
    %v451 = vpop.f32.mrf.mxu0
    %452 = vdwg.mxu0
    %453 = vst [vmem:[#allocation7] sm:$0x3] %v448
    // Predicated region
    $region26: #{tpu_custom_call.1} parent=1 // pred_check
      _
    $region27: #{tpu_custom_call.1} parent=1 // pred_check_branch
      %455 = sbr.rel (0) target = $region29
    $region28: #{tpu_custom_call.1} parent=1 // pred_region
      %s457 = ssub.s32 32, 32
      %458 = vsyncadd [#allocation4], %s457
      %s460 = sshll.u32 [#allocation7], 4
      %s461 = int_to_ptr.vmem [resolvable:$true] %s460
      %463 = dma.vmem_to_hbm [thread:$0]  %s461, 32, %s4, [#allocation4]
    $region29: #{tpu_custom_call.1} parent=1 // pred_fallthru
      _
    // Predicated region
    $region30: #{tpu_custom_call.1} parent=1 // pred_check
      _
    $region31: #{tpu_custom_call.1} parent=1 // pred_check_branch
      %465 = sbr.rel (0) target = $region33
    $region32: #{tpu_custom_call.1} parent=1 // pred_region
      %466 = dma.done [#allocation4], 32
    $region33: #{tpu_custom_call.1} parent=1 // pred_fallthru
      _
    %467 = vsyncpa [#allocation3], 1
    %468 = vsyncpa [#allocation6], 1
    %469 = vsyncpa [#allocation4], 1

</llo_original>
